<compile_context>
chip_gen: v5e
topology: v5e:2x2
jax: 0.10.0
libtpu: 0.0.40
codegen_flags: <defaults>
</compile_context>

<pallas_src>
import jax
import jax.numpy as jnp
import numpy as np
from jax import lax
from jax.experimental import pallas as pl
from jax.experimental.pallas import tpu as pltpu

# Module hyperparameters (from the PyTorch script)
HIDDEN = 2
INPUT = 5
NUM_CLASSES = 1
NUM_LAYERS = 1      # kernel implements a single bidirectional layer
SEQ_LEN = 8
BATCH = 2

_G = 4 * HIDDEN                      # gate width per direction
_BP = 8                              # batch padded to sublane granularity

# ---- packed-parameter slab layout (rows x 128 lanes, f32) ----
# i/f/o gate columns of Wih, Whh and the fused bias are PRE-SCALED by 0.5 so the
# kernel can use a single tanh per step (sigmoid(x) = 0.5*tanh(x/2) + 0.5).
ROW_WIH = 0                          # INPUT rows : [Wih_f.T | Wih_b.T]   cols 0:2G
ROW_BIAS = ROW_WIH + INPUT           # 1 row      : [b_f | b_b]           cols 0:2G
ROW_WHH = ROW_BIAS + 1               # HIDDEN rows: Whh_f.T               cols 0:G
ROW_FCW_F = ROW_WHH + HIDDEN         # HIDDEN rows: fc.weight[:, :H].T    cols 0:C
ROW_FCW_B = ROW_FCW_F + HIDDEN       # HIDDEN rows: fc.weight[:, H:].T    cols 0:C
ROW_FCB = ROW_FCW_B + HIDDEN         # 1 row      : fc.bias               cols 0:C
_N_ROWS = ((ROW_FCB + 1 + 7) // 8) * 8
_PACK_LANES = 128


def bilstm_kernel(x_ref, p_ref, out_ref):
    """x_ref: (T*_BP, I) time-major, batch zero-padded to _BP rows per step.
    p_ref: (_N_ROWS, 128) packed params (i/f/o columns pre-halved).
    out_ref: (B, C)."""
    TB, I = x_ref.shape
    BP = _BP
    T = TB // BP
    H = HIDDEN
    G = 4 * H
    C = NUM_CLASSES
    B = out_ref.shape[0]

    # ---- static slices of the packed parameter slab ----
    wih_all = p_ref[ROW_WIH:ROW_WIH + I, 0:2 * G]          # (I, 8H)
    b_all = p_ref[ROW_BIAS:ROW_BIAS + 1, 0:2 * G]          # (1, 8H)
    # Recurrent weight rows kept as (1, 4H); the (BP,1)*(1,4H) products below let
    # the compiler replicate them across sublanes (no materialized broadcast_to).
    whh_rows = [p_ref[ROW_WHH + j:ROW_WHH + j + 1, 0:G] for j in range(H)]
    fcw_f = p_ref[ROW_FCW_F:ROW_FCW_F + H, 0:C]            # (H, C)
    fcw_b = p_ref[ROW_FCW_B:ROW_FCW_B + H, 0:C]            # (H, C)
    fcb = p_ref[ROW_FCB:ROW_FCB + 1, 0:C]                  # (1, C)

    # ---- hoisted input projection for BOTH directions: ONE matmul, off the
    #      serial chain.  cols [0:4H] = forward gates, [4H:8H] = reverse gates.
    gx = jnp.dot(x_ref[...], wih_all,
                 preferred_element_type=jnp.float32) + b_all    # (T*BP, 8H)

    h = jnp.zeros((BP, H), jnp.float32)
    c = jnp.zeros((BP, H), jnp.float32)

    # ---- forward recurrence, fully unrolled (T small & static) ----
    for t in range(T):
        gx_t = gx[t * BP:(t + 1) * BP, 0:G]            # sublane-aligned pick (BP, 4H)
        # recurrent h @ Whh.T as a VPU broadcast-MAC (no MXU on the chain)
        rec = h[:, 0:1] * whh_rows[0]
        for j in range(1, H):
            rec = rec + h[:, j:j + 1] * whh_rows[j]
        gates = gx_t + rec                              # i/f/o columns are orig/2
        tg = jnp.tanh(gates)                            # single EUP op for all gates
        sg = tg * 0.5 + 0.5                             # = sigmoid of the orig i/f/o
        c = sg[:, H:2 * H] * c + sg[:, 0:H] * tg[:, 2 * H:3 * H]   # f*c + i*g
        h = sg[:, 3 * H:4 * H] * jnp.tanh(c)                        # o*tanh(c)

    # ---- reverse direction at the last timestep: single step from zero state ----
    gb = gx[(T - 1) * BP:T * BP, G:2 * G]               # (BP, 4H)
    tb = jnp.tanh(gb)
    sb = tb * 0.5 + 0.5
    c_b = sb[:, 0:H] * tb[:, 2 * H:3 * H]               # i*g   (f*0 = 0)
    h_b = sb[:, 3 * H:4 * H] * jnp.tanh(c_b)

    # ---- fc(concat(h_fwd, h_bwd)) + relu (concat folded into two tiny matmuls) ----
    z = (jnp.dot(h, fcw_f, preferred_element_type=jnp.float32)
         + jnp.dot(h_b, fcw_b, preferred_element_type=jnp.float32)
         + fcb)                                          # (BP, C)
    out_ref[...] = jnp.maximum(z[0:B, :], 0.0)


def _halve_ifo(w):
    """Scale the i, f, o gate columns (last axis, PyTorch order i,f,g,o) by 0.5."""
    H = HIDDEN
    w = np.array(w, dtype=np.float32, copy=True)
    w[..., 0:2 * H] *= 0.5
    w[..., 3 * H:4 * H] *= 0.5
    return w


def pack_params(params):
    """Pack all weights/biases into a single (rows, 128) f32 slab.

    Pure numpy; call ONCE at init and reuse the result for every forward."""
    (wih_f, whh_f, bih_f, bhh_f,
     wih_b, whh_b, bih_b, bhh_b, fcw, fcb) = [
        np.asarray(p, dtype=np.float32) for p in params]
    H, I, C = HIDDEN, INPUT, NUM_CLASSES
    G = 4 * H
    slab = np.zeros((_N_ROWS, _PACK_LANES), np.float32)
    slab[ROW_WIH:ROW_WIH + I, 0:G] = _halve_ifo(wih_f.T)
    slab[ROW_WIH:ROW_WIH + I, G:2 * G] = _halve_ifo(wih_b.T)
    slab[ROW_BIAS, 0:G] = _halve_ifo(bih_f + bhh_f)
    slab[ROW_BIAS, G:2 * G] = _halve_ifo(bih_b + bhh_b)
    slab[ROW_WHH:ROW_WHH + H, 0:G] = _halve_ifo(whh_f.T)
    slab[ROW_FCW_F:ROW_FCW_F + H, 0:C] = fcw[:, :H].T
    slab[ROW_FCW_B:ROW_FCW_B + H, 0:C] = fcw[:, H:].T
    slab[ROW_FCB, 0:C] = fcb
    return jnp.asarray(slab)


def bilstm_forward(x, slab):
    """x: (B, T, I) float32, batch_first exactly like the PyTorch module.
    slab: pre-packed (16, 128) parameter slab from pack_params (built once)."""
    B, T, I = x.shape
    # Time-major, sublane-padded layout: (T, B, I) -> pad B to 8 -> (T*8, I).
    xp = jnp.transpose(x.astype(jnp.float32), (1, 0, 2))
    xp = jnp.pad(xp, ((0, 0), (0, _BP - B), (0, 0)))
    xp = xp.reshape(T * _BP, I)

    vmem = pl.BlockSpec(memory_space=pltpu.MemorySpace.VMEM)
    return pl.pallas_call(
        bilstm_kernel,
        out_shape=jax.ShapeDtypeStruct((B, NUM_CLASSES), jnp.float32),
        in_specs=[vmem, vmem],
        out_specs=vmem,
    )(xp, slab)


def reference(x, params):
    """Pure-JAX replica of the PyTorch forward (full bidirectional scan)."""
    (wih_f, whh_f, bih_f, bhh_f,
     wih_b, whh_b, bih_b, bhh_b, fcw, fcb) = params
    B, T, I = x.shape
    H = HIDDEN
    zeros = jnp.zeros((B, H), jnp.float32)
    x_tm = jnp.transpose(x, (1, 0, 2))                               # (T, B, I)

    def cell(x_t, h, c, wih, whh, bih, bhh):
        gates = x_t @ wih.T + h @ whh.T + bih + bhh
        i = jax.nn.sigmoid(gates[:, 0 * H:1 * H])
        f = jax.nn.sigmoid(gates[:, 1 * H:2 * H])
        g = jnp.tanh(gates[:, 2 * H:3 * H])
        o = jax.nn.sigmoid(gates[:, 3 * H:4 * H])
        c_new = f * c + i * g
        return o * jnp.tanh(c_new), c_new

    def fstep(carry, x_t):
        h, c = carry
        h, c = cell(x_t, h, c, wih_f, whh_f, bih_f, bhh_f)
        return (h, c), h

    (h_fwd_T, _), _ = lax.scan(fstep, (zeros, zeros), x_tm)

    def bstep(carry, x_t):
        h, c = carry
        h, c = cell(x_t, h, c, wih_b, whh_b, bih_b, bhh_b)
        return (h, c), h

    (_, _), hs_b = lax.scan(bstep, (zeros, zeros), x_tm[::-1])
    h_bwd_at_last = hs_b[0]                 # reverse-direction output at index T-1

    out = jnp.concatenate([h_fwd_T, h_bwd_at_last], axis=-1) @ fcw.T + fcb
    return jnp.maximum(out, 0.0)


def init_params(key):
    """Deterministic init mimicking PyTorch's U(-1/sqrt(H), 1/sqrt(H))."""
    H, I, C = HIDDEN, INPUT, NUM_CLASSES
    k = 1.0 / np.sqrt(H)
    kfc = 1.0 / np.sqrt(2 * H)
    keys = jax.random.split(key, 10)
    u = lambda kk, shape, lim: jax.random.uniform(kk, shape, jnp.float32, -lim, lim)
    return (
        u(keys[0], (4 * H, I), k),    # weight_ih_l0
        u(keys[1], (4 * H, H), k),    # weight_hh_l0
        u(keys[2], (4 * H,), k),      # bias_ih_l0
        u(keys[3], (4 * H,), k),      # bias_hh_l0
        u(keys[4], (4 * H, I), k),    # weight_ih_l0_reverse
        u(keys[5], (4 * H, H), k),    # weight_hh_l0_reverse
        u(keys[6], (4 * H,), k),      # bias_ih_l0_reverse
        u(keys[7], (4 * H,), k),      # bias_hh_l0_reverse
        u(keys[8], (C, 2 * H), kfc),  # fc.weight
        u(keys[9], (C,), kfc),        # fc.bias
    )


if __name__ == "__main__":
    key = jax.random.PRNGKey(0)
    pkey, xkey = jax.random.split(key)
    params = init_params(pkey)
    slab = pack_params(params)        # packed ONCE at init (hoisted off the fwd path)
    x = jax.random.normal(xkey, (BATCH, SEQ_LEN, INPUT), jnp.float32)

    out = jax.block_until_ready(bilstm_forward(x, slab))
    ref = jax.block_until_ready(reference(x, params))

    assert out.shape == (BATCH, NUM_CLASSES)
    np.testing.assert_allclose(np.asarray(out), np.asarray(ref), rtol=1e-4, atol=1e-4)
    print("KERNEL_OK")
</pallas_src>

<mosaic_0001>
module attributes {stable_mosaic.version = 11 : i64} {
  func.func @bilstm_kernel(%arg0: memref<64x5xf32, #tpu.memory_space<vmem>>, %arg1: memref<16x128xf32, #tpu.memory_space<vmem>>, %arg2: memref<2x1xf32, #tpu.memory_space<vmem>>) attributes {dimension_semantics = [], scalar_prefetch = 0 : i64, scratch_operands = 0 : i64, tpu.core_type = #tpu.core_type<tc>} {
    %c0 = arith.constant 0 : index
    %c0_0 = arith.constant 0 : index
    %0 = vector.load %arg1[%c0, %c0_0] : memref<16x128xf32, #tpu.memory_space<vmem>>, vector<5x16xf32>
    %c5 = arith.constant 5 : index
    %c0_1 = arith.constant 0 : index
    %1 = vector.load %arg1[%c5, %c0_1] : memref<16x128xf32, #tpu.memory_space<vmem>>, vector<1x16xf32>
    %c6 = arith.constant 6 : index
    %c0_2 = arith.constant 0 : index
    %2 = vector.load %arg1[%c6, %c0_2] : memref<16x128xf32, #tpu.memory_space<vmem>>, vector<1x8xf32>
    %c7 = arith.constant 7 : index
    %c0_3 = arith.constant 0 : index
    %3 = vector.load %arg1[%c7, %c0_3] : memref<16x128xf32, #tpu.memory_space<vmem>>, vector<1x8xf32>
    %c8 = arith.constant 8 : index
    %c0_4 = arith.constant 0 : index
    %4 = vector.load %arg1[%c8, %c0_4] : memref<16x128xf32, #tpu.memory_space<vmem>>, vector<2x1xf32>
    %c10 = arith.constant 10 : index
    %c0_5 = arith.constant 0 : index
    %5 = vector.load %arg1[%c10, %c0_5] : memref<16x128xf32, #tpu.memory_space<vmem>>, vector<2x1xf32>
    %c12 = arith.constant 12 : index
    %c0_6 = arith.constant 0 : index
    %6 = vector.load %arg1[%c12, %c0_6] : memref<16x128xf32, #tpu.memory_space<vmem>>, vector<1x1xf32>
    %c0_7 = arith.constant 0 : index
    %c0_8 = arith.constant 0 : index
    %7 = vector.load %arg0[%c0_7, %c0_8] : memref<64x5xf32, #tpu.memory_space<vmem>>, vector<64x5xf32>
    %cst = arith.constant dense<0.000000e+00> : vector<64x16xf32>
    %8 = tpu.matmul %7, %0, %cst {dimension_numbers = #tpu.dot_dimension_numbers<[1], [0], [0], [1], [0, 0, 1, 1], [], []>} : vector<64x5xf32>, vector<5x16xf32>, vector<64x16xf32> -> vector<64x16xf32>
    %9 = vector.broadcast %1 : vector<1x16xf32> to vector<64x16xf32>
    %10 = arith.addf %8, %9 : vector<64x16xf32>
    %cst_9 = arith.constant 0.000000e+00 : f32
    %11 = vector.broadcast %cst_9 : f32 to vector<8x2xf32>
    %cst_10 = arith.constant 0.000000e+00 : f32
    %12 = vector.broadcast %cst_10 : f32 to vector<8x2xf32>
    %13 = vector.extract_strided_slice %10 {offsets = [0, 0], sizes = [8, 8], strides = [1, 1]} : vector<64x16xf32> to vector<8x8xf32>
    %14 = vector.extract_strided_slice %11 {offsets = [0, 0], sizes = [8, 1], strides = [1, 1]} : vector<8x2xf32> to vector<8x1xf32>
    %15 = vector.broadcast %14 : vector<8x1xf32> to vector<8x8xf32>
    %16 = vector.broadcast %2 : vector<1x8xf32> to vector<8x8xf32>
    %17 = arith.mulf %15, %16 : vector<8x8xf32>
    %18 = vector.extract_strided_slice %11 {offsets = [0, 1], sizes = [8, 1], strides = [1, 1]} : vector<8x2xf32> to vector<8x1xf32>
    %19 = vector.broadcast %18 : vector<8x1xf32> to vector<8x8xf32>
    %20 = vector.broadcast %3 : vector<1x8xf32> to vector<8x8xf32>
    %21 = arith.mulf %19, %20 : vector<8x8xf32>
    %22 = arith.addf %17, %21 : vector<8x8xf32>
    %23 = arith.addf %13, %22 : vector<8x8xf32>
    %24 = math.tanh %23 : vector<8x8xf32>
    %cst_11 = arith.constant 5.000000e-01 : f32
    %25 = vector.broadcast %cst_11 : f32 to vector<8x8xf32>
    %26 = arith.mulf %24, %25 : vector<8x8xf32>
    %cst_12 = arith.constant 5.000000e-01 : f32
    %27 = vector.broadcast %cst_12 : f32 to vector<8x8xf32>
    %28 = arith.addf %26, %27 : vector<8x8xf32>
    %29 = vector.extract_strided_slice %28 {offsets = [0, 2], sizes = [8, 2], strides = [1, 1]} : vector<8x8xf32> to vector<8x2xf32>
    %30 = arith.mulf %29, %12 : vector<8x2xf32>
    %31 = vector.extract_strided_slice %28 {offsets = [0, 0], sizes = [8, 2], strides = [1, 1]} : vector<8x8xf32> to vector<8x2xf32>
    %32 = vector.extract_strided_slice %24 {offsets = [0, 4], sizes = [8, 2], strides = [1, 1]} : vector<8x8xf32> to vector<8x2xf32>
    %33 = arith.mulf %31, %32 : vector<8x2xf32>
    %34 = arith.addf %30, %33 : vector<8x2xf32>
    %35 = vector.extract_strided_slice %28 {offsets = [0, 6], sizes = [8, 2], strides = [1, 1]} : vector<8x8xf32> to vector<8x2xf32>
    %36 = math.tanh %34 : vector<8x2xf32>
    %37 = arith.mulf %35, %36 : vector<8x2xf32>
    %38 = vector.extract_strided_slice %10 {offsets = [8, 0], sizes = [8, 8], strides = [1, 1]} : vector<64x16xf32> to vector<8x8xf32>
    %39 = vector.extract_strided_slice %37 {offsets = [0, 0], sizes = [8, 1], strides = [1, 1]} : vector<8x2xf32> to vector<8x1xf32>
    %40 = vector.broadcast %39 : vector<8x1xf32> to vector<8x8xf32>
    %41 = vector.broadcast %2 : vector<1x8xf32> to vector<8x8xf32>
    %42 = arith.mulf %40, %41 : vector<8x8xf32>
    %43 = vector.extract_strided_slice %37 {offsets = [0, 1], sizes = [8, 1], strides = [1, 1]} : vector<8x2xf32> to vector<8x1xf32>
    %44 = vector.broadcast %43 : vector<8x1xf32> to vector<8x8xf32>
    %45 = vector.broadcast %3 : vector<1x8xf32> to vector<8x8xf32>
    %46 = arith.mulf %44, %45 : vector<8x8xf32>
    %47 = arith.addf %42, %46 : vector<8x8xf32>
    %48 = arith.addf %38, %47 : vector<8x8xf32>
    %49 = math.tanh %48 : vector<8x8xf32>
    %cst_13 = arith.constant 5.000000e-01 : f32
    %50 = vector.broadcast %cst_13 : f32 to vector<8x8xf32>
    %51 = arith.mulf %49, %50 : vector<8x8xf32>
    %cst_14 = arith.constant 5.000000e-01 : f32
    %52 = vector.broadcast %cst_14 : f32 to vector<8x8xf32>
    %53 = arith.addf %51, %52 : vector<8x8xf32>
    %54 = vector.extract_strided_slice %53 {offsets = [0, 2], sizes = [8, 2], strides = [1, 1]} : vector<8x8xf32> to vector<8x2xf32>
    %55 = arith.mulf %54, %34 : vector<8x2xf32>
    %56 = vector.extract_strided_slice %53 {offsets = [0, 0], sizes = [8, 2], strides = [1, 1]} : vector<8x8xf32> to vector<8x2xf32>
    %57 = vector.extract_strided_slice %49 {offsets = [0, 4], sizes = [8, 2], strides = [1, 1]} : vector<8x8xf32> to vector<8x2xf32>
    %58 = arith.mulf %56, %57 : vector<8x2xf32>
    %59 = arith.addf %55, %58 : vector<8x2xf32>
    %60 = vector.extract_strided_slice %53 {offsets = [0, 6], sizes = [8, 2], strides = [1, 1]} : vector<8x8xf32> to vector<8x2xf32>
    %61 = math.tanh %59 : vector<8x2xf32>
    %62 = arith.mulf %60, %61 : vector<8x2xf32>
    %63 = vector.extract_strided_slice %10 {offsets = [16, 0], sizes = [8, 8], strides = [1, 1]} : vector<64x16xf32> to vector<8x8xf32>
    %64 = vector.extract_strided_slice %62 {offsets = [0, 0], sizes = [8, 1], strides = [1, 1]} : vector<8x2xf32> to vector<8x1xf32>
    %65 = vector.broadcast %64 : vector<8x1xf32> to vector<8x8xf32>
    %66 = vector.broadcast %2 : vector<1x8xf32> to vector<8x8xf32>
    %67 = arith.mulf %65, %66 : vector<8x8xf32>
    %68 = vector.extract_strided_slice %62 {offsets = [0, 1], sizes = [8, 1], strides = [1, 1]} : vector<8x2xf32> to vector<8x1xf32>
    %69 = vector.broadcast %68 : vector<8x1xf32> to vector<8x8xf32>
    %70 = vector.broadcast %3 : vector<1x8xf32> to vector<8x8xf32>
    %71 = arith.mulf %69, %70 : vector<8x8xf32>
    %72 = arith.addf %67, %71 : vector<8x8xf32>
    %73 = arith.addf %63, %72 : vector<8x8xf32>
    %74 = math.tanh %73 : vector<8x8xf32>
    %cst_15 = arith.constant 5.000000e-01 : f32
    %75 = vector.broadcast %cst_15 : f32 to vector<8x8xf32>
    %76 = arith.mulf %74, %75 : vector<8x8xf32>
    %cst_16 = arith.constant 5.000000e-01 : f32
    %77 = vector.broadcast %cst_16 : f32 to vector<8x8xf32>
    %78 = arith.addf %76, %77 : vector<8x8xf32>
    %79 = vector.extract_strided_slice %78 {offsets = [0, 2], sizes = [8, 2], strides = [1, 1]} : vector<8x8xf32> to vector<8x2xf32>
    %80 = arith.mulf %79, %59 : vector<8x2xf32>
    %81 = vector.extract_strided_slice %78 {offsets = [0, 0], sizes = [8, 2], strides = [1, 1]} : vector<8x8xf32> to vector<8x2xf32>
    %82 = vector.extract_strided_slice %74 {offsets = [0, 4], sizes = [8, 2], strides = [1, 1]} : vector<8x8xf32> to vector<8x2xf32>
    %83 = arith.mulf %81, %82 : vector<8x2xf32>
    %84 = arith.addf %80, %83 : vector<8x2xf32>
    %85 = vector.extract_strided_slice %78 {offsets = [0, 6], sizes = [8, 2], strides = [1, 1]} : vector<8x8xf32> to vector<8x2xf32>
    %86 = math.tanh %84 : vector<8x2xf32>
    %87 = arith.mulf %85, %86 : vector<8x2xf32>
    %88 = vector.extract_strided_slice %10 {offsets = [24, 0], sizes = [8, 8], strides = [1, 1]} : vector<64x16xf32> to vector<8x8xf32>
    %89 = vector.extract_strided_slice %87 {offsets = [0, 0], sizes = [8, 1], strides = [1, 1]} : vector<8x2xf32> to vector<8x1xf32>
    %90 = vector.broadcast %89 : vector<8x1xf32> to vector<8x8xf32>
    %91 = vector.broadcast %2 : vector<1x8xf32> to vector<8x8xf32>
    %92 = arith.mulf %90, %91 : vector<8x8xf32>
    %93 = vector.extract_strided_slice %87 {offsets = [0, 1], sizes = [8, 1], strides = [1, 1]} : vector<8x2xf32> to vector<8x1xf32>
    %94 = vector.broadcast %93 : vector<8x1xf32> to vector<8x8xf32>
    %95 = vector.broadcast %3 : vector<1x8xf32> to vector<8x8xf32>
    %96 = arith.mulf %94, %95 : vector<8x8xf32>
    %97 = arith.addf %92, %96 : vector<8x8xf32>
    %98 = arith.addf %88, %97 : vector<8x8xf32>
    %99 = math.tanh %98 : vector<8x8xf32>
    %cst_17 = arith.constant 5.000000e-01 : f32
    %100 = vector.broadcast %cst_17 : f32 to vector<8x8xf32>
    %101 = arith.mulf %99, %100 : vector<8x8xf32>
    %cst_18 = arith.constant 5.000000e-01 : f32
    %102 = vector.broadcast %cst_18 : f32 to vector<8x8xf32>
    %103 = arith.addf %101, %102 : vector<8x8xf32>
    %104 = vector.extract_strided_slice %103 {offsets = [0, 2], sizes = [8, 2], strides = [1, 1]} : vector<8x8xf32> to vector<8x2xf32>
    %105 = arith.mulf %104, %84 : vector<8x2xf32>
    %106 = vector.extract_strided_slice %103 {offsets = [0, 0], sizes = [8, 2], strides = [1, 1]} : vector<8x8xf32> to vector<8x2xf32>
    %107 = vector.extract_strided_slice %99 {offsets = [0, 4], sizes = [8, 2], strides = [1, 1]} : vector<8x8xf32> to vector<8x2xf32>
    %108 = arith.mulf %106, %107 : vector<8x2xf32>
    %109 = arith.addf %105, %108 : vector<8x2xf32>
    %110 = vector.extract_strided_slice %103 {offsets = [0, 6], sizes = [8, 2], strides = [1, 1]} : vector<8x8xf32> to vector<8x2xf32>
    %111 = math.tanh %109 : vector<8x2xf32>
    %112 = arith.mulf %110, %111 : vector<8x2xf32>
    %113 = vector.extract_strided_slice %10 {offsets = [32, 0], sizes = [8, 8], strides = [1, 1]} : vector<64x16xf32> to vector<8x8xf32>
    %114 = vector.extract_strided_slice %112 {offsets = [0, 0], sizes = [8, 1], strides = [1, 1]} : vector<8x2xf32> to vector<8x1xf32>
    %115 = vector.broadcast %114 : vector<8x1xf32> to vector<8x8xf32>
    %116 = vector.broadcast %2 : vector<1x8xf32> to vector<8x8xf32>
    %117 = arith.mulf %115, %116 : vector<8x8xf32>
    %118 = vector.extract_strided_slice %112 {offsets = [0, 1], sizes = [8, 1], strides = [1, 1]} : vector<8x2xf32> to vector<8x1xf32>
    %119 = vector.broadcast %118 : vector<8x1xf32> to vector<8x8xf32>
    %120 = vector.broadcast %3 : vector<1x8xf32> to vector<8x8xf32>
    %121 = arith.mulf %119, %120 : vector<8x8xf32>
    %122 = arith.addf %117, %121 : vector<8x8xf32>
    %123 = arith.addf %113, %122 : vector<8x8xf32>
    %124 = math.tanh %123 : vector<8x8xf32>
    %cst_19 = arith.constant 5.000000e-01 : f32
    %125 = vector.broadcast %cst_19 : f32 to vector<8x8xf32>
    %126 = arith.mulf %124, %125 : vector<8x8xf32>
    %cst_20 = arith.constant 5.000000e-01 : f32
    %127 = vector.broadcast %cst_20 : f32 to vector<8x8xf32>
    %128 = arith.addf %126, %127 : vector<8x8xf32>
    %129 = vector.extract_strided_slice %128 {offsets = [0, 2], sizes = [8, 2], strides = [1, 1]} : vector<8x8xf32> to vector<8x2xf32>
    %130 = arith.mulf %129, %109 : vector<8x2xf32>
    %131 = vector.extract_strided_slice %128 {offsets = [0, 0], sizes = [8, 2], strides = [1, 1]} : vector<8x8xf32> to vector<8x2xf32>
    %132 = vector.extract_strided_slice %124 {offsets = [0, 4], sizes = [8, 2], strides = [1, 1]} : vector<8x8xf32> to vector<8x2xf32>
    %133 = arith.mulf %131, %132 : vector<8x2xf32>
    %134 = arith.addf %130, %133 : vector<8x2xf32>
    %135 = vector.extract_strided_slice %128 {offsets = [0, 6], sizes = [8, 2], strides = [1, 1]} : vector<8x8xf32> to vector<8x2xf32>
    %136 = math.tanh %134 : vector<8x2xf32>
    %137 = arith.mulf %135, %136 : vector<8x2xf32>
    %138 = vector.extract_strided_slice %10 {offsets = [40, 0], sizes = [8, 8], strides = [1, 1]} : vector<64x16xf32> to vector<8x8xf32>
    %139 = vector.extract_strided_slice %137 {offsets = [0, 0], sizes = [8, 1], strides = [1, 1]} : vector<8x2xf32> to vector<8x1xf32>
    %140 = vector.broadcast %139 : vector<8x1xf32> to vector<8x8xf32>
    %141 = vector.broadcast %2 : vector<1x8xf32> to vector<8x8xf32>
    %142 = arith.mulf %140, %141 : vector<8x8xf32>
    %143 = vector.extract_strided_slice %137 {offsets = [0, 1], sizes = [8, 1], strides = [1, 1]} : vector<8x2xf32> to vector<8x1xf32>
    %144 = vector.broadcast %143 : vector<8x1xf32> to vector<8x8xf32>
    %145 = vector.broadcast %3 : vector<1x8xf32> to vector<8x8xf32>
    %146 = arith.mulf %144, %145 : vector<8x8xf32>
    %147 = arith.addf %142, %146 : vector<8x8xf32>
    %148 = arith.addf %138, %147 : vector<8x8xf32>
    %149 = math.tanh %148 : vector<8x8xf32>
    %cst_21 = arith.constant 5.000000e-01 : f32
    %150 = vector.broadcast %cst_21 : f32 to vector<8x8xf32>
    %151 = arith.mulf %149, %150 : vector<8x8xf32>
    %cst_22 = arith.constant 5.000000e-01 : f32
    %152 = vector.broadcast %cst_22 : f32 to vector<8x8xf32>
    %153 = arith.addf %151, %152 : vector<8x8xf32>
    %154 = vector.extract_strided_slice %153 {offsets = [0, 2], sizes = [8, 2], strides = [1, 1]} : vector<8x8xf32> to vector<8x2xf32>
    %155 = arith.mulf %154, %134 : vector<8x2xf32>
    %156 = vector.extract_strided_slice %153 {offsets = [0, 0], sizes = [8, 2], strides = [1, 1]} : vector<8x8xf32> to vector<8x2xf32>
    %157 = vector.extract_strided_slice %149 {offsets = [0, 4], sizes = [8, 2], strides = [1, 1]} : vector<8x8xf32> to vector<8x2xf32>
    %158 = arith.mulf %156, %157 : vector<8x2xf32>
    %159 = arith.addf %155, %158 : vector<8x2xf32>
    %160 = vector.extract_strided_slice %153 {offsets = [0, 6], sizes = [8, 2], strides = [1, 1]} : vector<8x8xf32> to vector<8x2xf32>
    %161 = math.tanh %159 : vector<8x2xf32>
    %162 = arith.mulf %160, %161 : vector<8x2xf32>
    %163 = vector.extract_strided_slice %10 {offsets = [48, 0], sizes = [8, 8], strides = [1, 1]} : vector<64x16xf32> to vector<8x8xf32>
    %164 = vector.extract_strided_slice %162 {offsets = [0, 0], sizes = [8, 1], strides = [1, 1]} : vector<8x2xf32> to vector<8x1xf32>
    %165 = vector.broadcast %164 : vector<8x1xf32> to vector<8x8xf32>
    %166 = vector.broadcast %2 : vector<1x8xf32> to vector<8x8xf32>
    %167 = arith.mulf %165, %166 : vector<8x8xf32>
    %168 = vector.extract_strided_slice %162 {offsets = [0, 1], sizes = [8, 1], strides = [1, 1]} : vector<8x2xf32> to vector<8x1xf32>
    %169 = vector.broadcast %168 : vector<8x1xf32> to vector<8x8xf32>
    %170 = vector.broadcast %3 : vector<1x8xf32> to vector<8x8xf32>
    %171 = arith.mulf %169, %170 : vector<8x8xf32>
    %172 = arith.addf %167, %171 : vector<8x8xf32>
    %173 = arith.addf %163, %172 : vector<8x8xf32>
    %174 = math.tanh %173 : vector<8x8xf32>
    %cst_23 = arith.constant 5.000000e-01 : f32
    %175 = vector.broadcast %cst_23 : f32 to vector<8x8xf32>
    %176 = arith.mulf %174, %175 : vector<8x8xf32>
    %cst_24 = arith.constant 5.000000e-01 : f32
    %177 = vector.broadcast %cst_24 : f32 to vector<8x8xf32>
    %178 = arith.addf %176, %177 : vector<8x8xf32>
    %179 = vector.extract_strided_slice %178 {offsets = [0, 2], sizes = [8, 2], strides = [1, 1]} : vector<8x8xf32> to vector<8x2xf32>
    %180 = arith.mulf %179, %159 : vector<8x2xf32>
    %181 = vector.extract_strided_slice %178 {offsets = [0, 0], sizes = [8, 2], strides = [1, 1]} : vector<8x8xf32> to vector<8x2xf32>
    %182 = vector.extract_strided_slice %174 {offsets = [0, 4], sizes = [8, 2], strides = [1, 1]} : vector<8x8xf32> to vector<8x2xf32>
    %183 = arith.mulf %181, %182 : vector<8x2xf32>
    %184 = arith.addf %180, %183 : vector<8x2xf32>
    %185 = vector.extract_strided_slice %178 {offsets = [0, 6], sizes = [8, 2], strides = [1, 1]} : vector<8x8xf32> to vector<8x2xf32>
    %186 = math.tanh %184 : vector<8x2xf32>
    %187 = arith.mulf %185, %186 : vector<8x2xf32>
    %188 = vector.extract_strided_slice %10 {offsets = [56, 0], sizes = [8, 8], strides = [1, 1]} : vector<64x16xf32> to vector<8x8xf32>
    %189 = vector.extract_strided_slice %187 {offsets = [0, 0], sizes = [8, 1], strides = [1, 1]} : vector<8x2xf32> to vector<8x1xf32>
    %190 = vector.broadcast %189 : vector<8x1xf32> to vector<8x8xf32>
    %191 = vector.broadcast %2 : vector<1x8xf32> to vector<8x8xf32>
    %192 = arith.mulf %190, %191 : vector<8x8xf32>
    %193 = vector.extract_strided_slice %187 {offsets = [0, 1], sizes = [8, 1], strides = [1, 1]} : vector<8x2xf32> to vector<8x1xf32>
    %194 = vector.broadcast %193 : vector<8x1xf32> to vector<8x8xf32>
    %195 = vector.broadcast %3 : vector<1x8xf32> to vector<8x8xf32>
    %196 = arith.mulf %194, %195 : vector<8x8xf32>
    %197 = arith.addf %192, %196 : vector<8x8xf32>
    %198 = arith.addf %188, %197 : vector<8x8xf32>
    %199 = math.tanh %198 : vector<8x8xf32>
    %cst_25 = arith.constant 5.000000e-01 : f32
    %200 = vector.broadcast %cst_25 : f32 to vector<8x8xf32>
    %201 = arith.mulf %199, %200 : vector<8x8xf32>
    %cst_26 = arith.constant 5.000000e-01 : f32
    %202 = vector.broadcast %cst_26 : f32 to vector<8x8xf32>
    %203 = arith.addf %201, %202 : vector<8x8xf32>
    %204 = vector.extract_strided_slice %203 {offsets = [0, 2], sizes = [8, 2], strides = [1, 1]} : vector<8x8xf32> to vector<8x2xf32>
    %205 = arith.mulf %204, %184 : vector<8x2xf32>
    %206 = vector.extract_strided_slice %203 {offsets = [0, 0], sizes = [8, 2], strides = [1, 1]} : vector<8x8xf32> to vector<8x2xf32>
    %207 = vector.extract_strided_slice %199 {offsets = [0, 4], sizes = [8, 2], strides = [1, 1]} : vector<8x8xf32> to vector<8x2xf32>
    %208 = arith.mulf %206, %207 : vector<8x2xf32>
    %209 = arith.addf %205, %208 : vector<8x2xf32>
    %210 = vector.extract_strided_slice %203 {offsets = [0, 6], sizes = [8, 2], strides = [1, 1]} : vector<8x8xf32> to vector<8x2xf32>
    %211 = math.tanh %209 : vector<8x2xf32>
    %212 = arith.mulf %210, %211 : vector<8x2xf32>
    %213 = vector.extract_strided_slice %10 {offsets = [56, 8], sizes = [8, 8], strides = [1, 1]} : vector<64x16xf32> to vector<8x8xf32>
    %214 = math.tanh %213 : vector<8x8xf32>
    %cst_27 = arith.constant 5.000000e-01 : f32
    %215 = vector.broadcast %cst_27 : f32 to vector<8x8xf32>
    %216 = arith.mulf %214, %215 : vector<8x8xf32>
    %cst_28 = arith.constant 5.000000e-01 : f32
    %217 = vector.broadcast %cst_28 : f32 to vector<8x8xf32>
    %218 = arith.addf %216, %217 : vector<8x8xf32>
    %219 = vector.extract_strided_slice %218 {offsets = [0, 0], sizes = [8, 2], strides = [1, 1]} : vector<8x8xf32> to vector<8x2xf32>
    %220 = vector.extract_strided_slice %214 {offsets = [0, 4], sizes = [8, 2], strides = [1, 1]} : vector<8x8xf32> to vector<8x2xf32>
    %221 = arith.mulf %219, %220 : vector<8x2xf32>
    %222 = vector.extract_strided_slice %218 {offsets = [0, 6], sizes = [8, 2], strides = [1, 1]} : vector<8x8xf32> to vector<8x2xf32>
    %223 = math.tanh %221 : vector<8x2xf32>
    %224 = arith.mulf %222, %223 : vector<8x2xf32>
    %cst_29 = arith.constant dense<0.000000e+00> : vector<8x1xf32>
    %225 = tpu.matmul %212, %4, %cst_29 {dimension_numbers = #tpu.dot_dimension_numbers<[1], [0], [0], [1], [0, 0, 1, 1], [], []>} : vector<8x2xf32>, vector<2x1xf32>, vector<8x1xf32> -> vector<8x1xf32>
    %cst_30 = arith.constant dense<0.000000e+00> : vector<8x1xf32>
    %226 = tpu.matmul %224, %5, %cst_30 {dimension_numbers = #tpu.dot_dimension_numbers<[1], [0], [0], [1], [0, 0, 1, 1], [], []>} : vector<8x2xf32>, vector<2x1xf32>, vector<8x1xf32> -> vector<8x1xf32>
    %227 = arith.addf %225, %226 : vector<8x1xf32>
    %228 = vector.broadcast %6 : vector<1x1xf32> to vector<8x1xf32>
    %229 = arith.addf %227, %228 : vector<8x1xf32>
    %230 = vector.extract_strided_slice %229 {offsets = [0, 0], sizes = [2, 1], strides = [1, 1]} : vector<8x1xf32> to vector<2x1xf32>
    %cst_31 = arith.constant 0.000000e+00 : f32
    %231 = vector.broadcast %cst_31 : f32 to vector<2x1xf32>
    %232 = arith.maximumf %230, %231 : vector<2x1xf32>
    %c0_32 = arith.constant 0 : index
    %c0_33 = arith.constant 0 : index
    %233 = vector.load %arg2[%c0_32, %c0_33] : memref<2x1xf32, #tpu.memory_space<vmem>>, vector<2x1xf32>
    tpu.vector_store %arg2[%c0_32, %c0_33], %232 {strides = array<i32>} : memref<2x1xf32, #tpu.memory_space<vmem>>, vector<2x1xf32>,
    return
  }
}

</mosaic_0001>

<llo_original>
// kernel: tpu_custom_call.1
$region0: #{tpu_custom_call.1}
  #allocation0 [shape = 'u32[]', space=smem, size = 0x4, offset = 0x4, fixed_abs, tag = 'smem constant byte address 0x4 - core index']
  #allocation1 [shape = 'u32[72,128]{1,0:T(1,128)}', space=vmem, size = 0x9000, scoped, tag = 'internal scratch']
  %s0 = inlined_call_operand.vmem [shape: f32[64,5], index: 0, kind: input, shape index: {}]
  %s1 = inlined_call_operand.vmem [shape: f32[16,128], index: 1, kind: input, shape index: {}]
  %s2 = inlined_call_operand.vmem [shape: f32[2,1], index: 2, kind: output, shape index: {}]
  %s3 = sld [smem:[#allocation0]]
  $region18: #{tpu_custom_call.1} parent=0
    _
  %s5 = ssub.s32 1, %s3
  %s6 = scalar_select 0, %s5, %s3
  // Predicated region
  $region2: #{tpu_custom_call.1} parent=0 // pred_check
    _
  $region3: #{tpu_custom_call.1} parent=0 // pred_check_branch
    %8 = sbr.rel (0) target = $region5
  $region4: #{tpu_custom_call.1} parent=0 // pred_region
    _
  $region5: #{tpu_custom_call.1} parent=0 // pred_fallthru
    _
  // Predicated region
  $region6: #{tpu_custom_call.1} parent=0 // pred_check
    _
  $region7: #{tpu_custom_call.1} parent=0 // pred_check_branch
    %10 = sbr.rel (0) target = $region9
  $region8: #{tpu_custom_call.1} parent=0 // pred_region
    _
  $region9: #{tpu_custom_call.1} parent=0 // pred_fallthru
    _
  %v11 = vld [vmem:[%s1] sm:$0x1f]
  %v12 = vld [vmem:[%s1 + $0x5] sm:$0x1]
  %v13 = vld [vmem:[%s1 + $0x6] sm:$0x1]
  %v14 = vld [vmem:[%s1 + $0x7] sm:$0x1]
  %v15 = vld [vmem:[%s1 + $0x8] sm:$0x3]
  %v16 = vld [vmem:[%s1 + $0xa] sm:$0x3]
  %v17 = vld [vmem:[%s1 + $0xc] sm:$0x1]
  %v18 = vld [vmem:[%s0] sm:$0xff]
  %v19 = vld [vmem:[%s0 + $0x8] sm:$0xff]
  %v20 = vld [vmem:[%s0 + $0x10] sm:$0xff]
  %v21 = vld [vmem:[%s0 + $0x18] sm:$0xff]
  %v22 = vld [vmem:[%s0 + $0x20] sm:$0xff]
  %v23 = vld [vmem:[%s0 + $0x28] sm:$0xff]
  %v24 = vld [vmem:[%s0 + $0x30] sm:$0xff]
  %v25 = vld [vmem:[%s0 + $0x38] sm:$0xff]
  %v26 = vperm.slane %v12, 0
  %vm27 = vcmask 39936
  %v29 = vsel %vm27, %v18, 0
  %v32 = vsel %vm27, %v19, 0
  %v35 = vsel %vm27, %v20, 0
  %v38 = vsel %vm27, %v21, 0
  %v41 = vsel %vm27, %v22, 0
  %v44 = vsel %vm27, %v23, 0
  %v47 = vsel %vm27, %v24, 0
  %v50 = vsel %vm27, %v25, 0
  %vm52 = vcmask 1044480
  %v54 = vsel %vm52, %v11, 0
  %56 = vmatpush.msra.mxu0 0.0
  %57 = vmatpush.msra.mxu0 0.0
  %58 = vmatpush.msra.mxu0 0.0
  %59 = vmatpush.msra.mxu0 0.0
  %60 = vmatpush.msra.mxu0 0.0
  %61 = vmatpush.msra.mxu0 0.0
  %62 = vmatpush.msra.mxu0 0.0
  %63 = vmatpush.msra.mxu0 0.0
  %64 = vmatpush.msra.mxu0 0.0
  %65 = vmatpush.msra.mxu0 0.0
  %66 = vmatpush.msra.mxu0 0.0
  %67 = vmatpush.msra.mxu0 0.0
  %68 = vmatpush.msra.mxu0 0.0
  %69 = vmatpush.msra.mxu0 0.0
  %70 = vmatpush.msra.mxu0 0.0
  %71 = vmatpush.msra.mxu0 %v54
  %72 = vmatmul.f32.gmra.mxu0 %v29
  %v73 = vpop.f32.mrf.mxu0
  %v74 = vadd.f32 %v26, %v73
  %75 = vmatmul.f32.gmra.mxu0 %v32
  %v76 = vpop.f32.mrf.mxu0
  %v77 = vadd.f32 %v26, %v76
  %78 = vmatmul.f32.gmra.mxu0 %v35
  %v79 = vpop.f32.mrf.mxu0
  %v80 = vadd.f32 %v26, %v79
  %81 = vmatmul.f32.gmra.mxu0 %v38
  %v82 = vpop.f32.mrf.mxu0
  %v83 = vadd.f32 %v26, %v82
  %84 = vmatmul.f32.gmra.mxu0 %v41
  %v85 = vpop.f32.mrf.mxu0
  %v86 = vadd.f32 %v26, %v85
  %87 = vmatmul.f32.gmra.mxu0 %v44
  %v88 = vpop.f32.mrf.mxu0
  %v89 = vadd.f32 %v26, %v88
  %90 = vmatmul.f32.gmra.mxu0 %v47
  %v91 = vpop.f32.mrf.mxu0
  %v92 = vadd.f32 %v26, %v91
  %93 = vmatmul.f32.gmra.mxu0 %v50
  %v94 = vpop.f32.mrf.mxu0
  %v95 = vadd.f32 %v26, %v94
  %96 = vdwg.mxu0
  %v97 = vperm.slane %v13, 0
  %v98 = vmul.f32 %v97, 0.0
  %v99 = vperm.slane %v14, 0
  %v100 = vmul.f32 %v99, 0.0
  %v101 = vadd.f32 %v98, %v100
  %v102 = vadd.f32 %v74, %v101
  %v103 = vtanh.pop %v102
  %v104 = vmul.f32 %v103, 0.5
  %v105 = vadd.f32 %v104, 0.5
  %v106 = vmul.f32 %v105, 0.0
  %108 = vrot.lane.b32.xlu0 %v103, 124
  %v109 = vpop.permute.xlu0 %108
  %v111 = vmul.f32 %v105, %v109
  %113 = vrot.lane.b32.xlu0 %v111, 2
  %v114 = vpop.permute.xlu0 %113
  %v116 = vadd.f32 %v106, %v114
  %v117 = vtanh.pop %v116
  %119 = vrot.lane.b32.xlu0 %v117, 4
  %v120 = vpop.permute.xlu0 %119
  %v122 = vmul.f32 %v105, %v120
  %124 = vset.pattern.permute.xlu0 6
  %125 = vperm.xlu0 %124, %v122
  %v126 = vpop.permute.xlu0 %125
  %v128 = vmul.f32 %v126, %v97
  %129 = vset.pattern.permute.xlu0 7
  %130 = vperm.xlu0 %129, %v122
  %v131 = vpop.permute.xlu0 %130
  %v133 = vmul.f32 %v131, %v99
  %v134 = vadd.f32 %v128, %v133
  %v135 = vadd.f32 %v77, %v134
  %v136 = vtanh.pop %v135
  %v137 = vmul.f32 %v136, 0.5
  %v138 = vadd.f32 %v137, 0.5
  %v139 = vmul.f32 %v138, %v116
  %141 = vrot.lane.b32.xlu0 %v136, 124
  %v142 = vpop.permute.xlu0 %141
  %v144 = vmul.f32 %v138, %v142
  %146 = vrot.lane.b32.xlu0 %v144, 2
  %v147 = vpop.permute.xlu0 %146
  %v149 = vadd.f32 %v139, %v147
  %v150 = vtanh.pop %v149
  %152 = vrot.lane.b32.xlu0 %v150, 4
  %v153 = vpop.permute.xlu0 %152
  %v155 = vmul.f32 %v138, %v153
  %157 = vset.pattern.permute.xlu0 6
  %158 = vperm.xlu0 %157, %v155
  %v159 = vpop.permute.xlu0 %158
  %v161 = vmul.f32 %v159, %v97
  %162 = vset.pattern.permute.xlu0 7
  %163 = vperm.xlu0 %162, %v155
  %v164 = vpop.permute.xlu0 %163
  %v166 = vmul.f32 %v164, %v99
  %v167 = vadd.f32 %v161, %v166
  %v168 = vadd.f32 %v80, %v167
  %v169 = vtanh.pop %v168
  %v170 = vmul.f32 %v169, 0.5
  %v171 = vadd.f32 %v170, 0.5
  %v172 = vmul.f32 %v171, %v149
  %174 = vrot.lane.b32.xlu0 %v169, 124
  %v175 = vpop.permute.xlu0 %174
  %v177 = vmul.f32 %v171, %v175
  %179 = vrot.lane.b32.xlu0 %v177, 2
  %v180 = vpop.permute.xlu0 %179
  %v182 = vadd.f32 %v172, %v180
  %v183 = vtanh.pop %v182
  %185 = vrot.lane.b32.xlu0 %v183, 4
  %v186 = vpop.permute.xlu0 %185
  %v188 = vmul.f32 %v171, %v186
  %190 = vset.pattern.permute.xlu0 6
  %191 = vperm.xlu0 %190, %v188
  %v192 = vpop.permute.xlu0 %191
  %v194 = vmul.f32 %v192, %v97
  %195 = vset.pattern.permute.xlu0 7
  %196 = vperm.xlu0 %195, %v188
  %v197 = vpop.permute.xlu0 %196
  %v199 = vmul.f32 %v197, %v99
  %v200 = vadd.f32 %v194, %v199
  %v201 = vadd.f32 %v83, %v200
  %v202 = vtanh.pop %v201
  %v203 = vmul.f32 %v202, 0.5
  %v204 = vadd.f32 %v203, 0.5
  %v205 = vmul.f32 %v204, %v182
  %207 = vrot.lane.b32.xlu0 %v202, 124
  %v208 = vpop.permute.xlu0 %207
  %v210 = vmul.f32 %v204, %v208
  %212 = vrot.lane.b32.xlu0 %v210, 2
  %v213 = vpop.permute.xlu0 %212
  %v215 = vadd.f32 %v205, %v213
  %v216 = vtanh.pop %v215
  %218 = vrot.lane.b32.xlu0 %v216, 4
  %v219 = vpop.permute.xlu0 %218
  %v221 = vmul.f32 %v204, %v219
  %223 = vset.pattern.permute.xlu0 6
  %224 = vperm.xlu0 %223, %v221
  %v225 = vpop.permute.xlu0 %224
  %v227 = vmul.f32 %v225, %v97
  %228 = vset.pattern.permute.xlu0 7
  %229 = vperm.xlu0 %228, %v221
  %v230 = vpop.permute.xlu0 %229
  %v232 = vmul.f32 %v230, %v99
  %v233 = vadd.f32 %v227, %v232
  %v234 = vadd.f32 %v86, %v233
  %v235 = vtanh.pop %v234
  %v236 = vmul.f32 %v235, 0.5
  %v237 = vadd.f32 %v236, 0.5
  %v238 = vmul.f32 %v237, %v215
  %240 = vrot.lane.b32.xlu0 %v235, 124
  %v241 = vpop.permute.xlu0 %240
  %v243 = vmul.f32 %v237, %v241
  %245 = vrot.lane.b32.xlu0 %v243, 2
  %v246 = vpop.permute.xlu0 %245
  %v248 = vadd.f32 %v238, %v246
  %v249 = vtanh.pop %v248
  %251 = vrot.lane.b32.xlu0 %v249, 4
  %v252 = vpop.permute.xlu0 %251
  %v254 = vmul.f32 %v237, %v252
  %256 = vset.pattern.permute.xlu0 6
  %257 = vperm.xlu0 %256, %v254
  %v258 = vpop.permute.xlu0 %257
  %v260 = vmul.f32 %v258, %v97
  %261 = vset.pattern.permute.xlu0 7
  %262 = vperm.xlu0 %261, %v254
  %v263 = vpop.permute.xlu0 %262
  %v265 = vmul.f32 %v263, %v99
  %v266 = vadd.f32 %v260, %v265
  %v267 = vadd.f32 %v89, %v266
  %v268 = vtanh.pop %v267
  %v269 = vmul.f32 %v268, 0.5
  %v270 = vadd.f32 %v269, 0.5
  %v271 = vmul.f32 %v270, %v248
  %273 = vrot.lane.b32.xlu0 %v268, 124
  %v274 = vpop.permute.xlu0 %273
  %v276 = vmul.f32 %v270, %v274
  %278 = vrot.lane.b32.xlu0 %v276, 2
  %v279 = vpop.permute.xlu0 %278
  %v281 = vadd.f32 %v271, %v279
  %v282 = vtanh.pop %v281
  %284 = vrot.lane.b32.xlu0 %v282, 4
  %v285 = vpop.permute.xlu0 %284
  %v287 = vmul.f32 %v270, %v285
  %289 = vset.pattern.permute.xlu0 6
  %290 = vperm.xlu0 %289, %v287
  %v291 = vpop.permute.xlu0 %290
  %v293 = vmul.f32 %v291, %v97
  %294 = vset.pattern.permute.xlu0 7
  %295 = vperm.xlu0 %294, %v287
  %v296 = vpop.permute.xlu0 %295
  %v298 = vmul.f32 %v296, %v99
  %v299 = vadd.f32 %v293, %v298
  %v300 = vadd.f32 %v92, %v299
  %v301 = vtanh.pop %v300
  %v302 = vmul.f32 %v301, 0.5
  %v303 = vadd.f32 %v302, 0.5
  %v304 = vmul.f32 %v303, %v281
  %306 = vrot.lane.b32.xlu0 %v301, 124
  %v307 = vpop.permute.xlu0 %306
  %v309 = vmul.f32 %v303, %v307
  %311 = vrot.lane.b32.xlu0 %v309, 2
  %v312 = vpop.permute.xlu0 %311
  %v314 = vadd.f32 %v304, %v312
  %v315 = vtanh.pop %v314
  %317 = vrot.lane.b32.xlu0 %v315, 4
  %v318 = vpop.permute.xlu0 %317
  %v320 = vmul.f32 %v303, %v318
  %322 = vset.pattern.permute.xlu0 6
  %323 = vperm.xlu0 %322, %v320
  %v324 = vpop.permute.xlu0 %323
  %v326 = vmul.f32 %v324, %v97
  %327 = vset.pattern.permute.xlu0 7
  %328 = vperm.xlu0 %327, %v320
  %v329 = vpop.permute.xlu0 %328
  %v331 = vmul.f32 %v329, %v99
  %v332 = vadd.f32 %v326, %v331
  %v333 = vadd.f32 %v95, %v332
  %v334 = vtanh.pop %v333
  %v335 = vmul.f32 %v334, 0.5
  %v336 = vadd.f32 %v335, 0.5
  %v337 = vmul.f32 %v336, %v314
  %339 = vrot.lane.b32.xlu0 %v334, 124
  %v340 = vpop.permute.xlu0 %339
  %v342 = vmul.f32 %v336, %v340
  %344 = vrot.lane.b32.xlu0 %v342, 2
  %v345 = vpop.permute.xlu0 %344
  %v347 = vadd.f32 %v337, %v345
  %v348 = vtanh.pop %v347
  %350 = vrot.lane.b32.xlu0 %v348, 4
  %v351 = vpop.permute.xlu0 %350
  %v353 = vmul.f32 %v336, %v351
  %v354 = vtanh.pop %v95
  %v355 = vmul.f32 %v354, 0.5
  %v356 = vadd.f32 %v355, 0.5
  %358 = vrot.lane.b32.xlu0 %v354, 124
  %v359 = vpop.permute.xlu0 %358
  %v361 = vmul.f32 %v356, %v359
  %v362 = vtanh.pop %v361
  %364 = vrot.lane.b32.xlu0 %v362, 6
  %v365 = vpop.permute.xlu0 %364
  %v367 = vmul.f32 %v356, %v365
  %369 = vrot.lane.b32.xlu0 %v367, 114
  %v370 = vpop.permute.xlu0 %369
  %vm371 = vcmask 15360
  %v372 = vsel %vm371, %v370, 0
  %vm374 = vcmask 1041408
  %v376 = vsel %vm374, %v16, 0
  %378 = vmatpush.msra.mxu0 0.0
  %379 = vmatpush.msra.mxu0 0.0
  %380 = vmatpush.msra.mxu0 0.0
  %381 = vmatpush.msra.mxu0 0.0
  %382 = vmatpush.msra.mxu0 0.0
  %383 = vmatpush.msra.mxu0 0.0
  %384 = vmatpush.msra.mxu0 0.0
  %385 = vmatpush.msra.mxu0 0.0
  %386 = vmatpush.msra.mxu0 0.0
  %387 = vmatpush.msra.mxu0 0.0
  %388 = vmatpush.msra.mxu0 0.0
  %389 = vmatpush.msra.mxu0 0.0
  %390 = vmatpush.msra.mxu0 0.0
  %391 = vmatpush.msra.mxu0 0.0
  %392 = vmatpush.msra.mxu0 0.0
  %393 = vmatpush.msra.mxu0 %v376
  %394 = vmatmul.f32.gmra.mxu0 %v372
  %v395 = vpop.f32.mrf.mxu0
  %v396 = vadd.f32 0.0, %v395
  %397 = vdwg.mxu0
  %399 = vrot.lane.b32.xlu0 %v353, 122
  %v400 = vpop.permute.xlu0 %399
  %v401 = vsel %vm371, %v400, 0
  %v404 = vsel %vm374, %v15, 0
  %406 = vmatpush.msra.mxu0 0.0
  %407 = vmatpush.msra.mxu0 0.0
  %408 = vmatpush.msra.mxu0 0.0
  %409 = vmatpush.msra.mxu0 0.0
  %410 = vmatpush.msra.mxu0 0.0
  %411 = vmatpush.msra.mxu0 0.0
  %412 = vmatpush.msra.mxu0 0.0
  %413 = vmatpush.msra.mxu0 0.0
  %414 = vmatpush.msra.mxu0 0.0
  %415 = vmatpush.msra.mxu0 0.0
  %416 = vmatpush.msra.mxu0 0.0
  %417 = vmatpush.msra.mxu0 0.0
  %418 = vmatpush.msra.mxu0 0.0
  %419 = vmatpush.msra.mxu0 0.0
  %420 = vmatpush.msra.mxu0 0.0
  %421 = vmatpush.msra.mxu0 %v404
  %422 = vmatmul.f32.gmra.mxu0 %v401
  %v423 = vpop.f32.mrf.mxu0
  %v424 = vadd.f32 %v396, %v423
  %425 = vdwg.mxu0
  %v426 = vperm.slane %v17, 0
  %v427 = vadd.f32 %v424, %v426
  %v428 = vmax.f32 %v427, 0.0
  %vm429 = vcmask 1024
  %430 = vst.msk [vmem:[%s2] sm:$0x3] %vm429, %v428
  // Predicated region
  $region10: #{tpu_custom_call.1} parent=0 // pred_check
    _
  $region11: #{tpu_custom_call.1} parent=0 // pred_check_branch
    %432 = sbr.rel (0) target = $region13
  $region12: #{tpu_custom_call.1} parent=0 // pred_region
    _
  $region13: #{tpu_custom_call.1} parent=0 // pred_fallthru
    _
  // Predicated region
  $region14: #{tpu_custom_call.1} parent=0 // pred_check
    _
  $region15: #{tpu_custom_call.1} parent=0 // pred_check_branch
    %434 = sbr.rel (0) target = $region17
  $region16: #{tpu_custom_call.1} parent=0 // pred_region
    _
  $region17: #{tpu_custom_call.1} parent=0 // pred_fallthru
    _

</llo_original>
